<compile_context>
chip_gen: v6e
topology: v6e:2x2x1
jax: 0.10.0
libtpu: 0.0.40
codegen_flags: <defaults>
</compile_context>

<pallas_src>
import math

import jax
import jax.numpy as jnp
from jax.experimental import pallas as pl
from jax.experimental.pallas import tpu as pltpu


def _build_pe_table(d_model: int, max_len: int) -> jnp.ndarray:
    """Deterministic sinusoidal table, identical to the PyTorch __init__ buffer."""
    position = jnp.arange(0, max_len, dtype=jnp.float32)[:, None]            # (L, 1)
    div_term = jnp.exp(
        jnp.arange(0, d_model, 2, dtype=jnp.float32)
        * -(math.log(10000.0) / d_model)
    )                                                                         # (D/2,)
    angles = position * div_term                                              # (L, D/2)
    pe = jnp.zeros((max_len, d_model), dtype=jnp.float32)
    pe = pe.at[:, 0::2].set(jnp.sin(angles))
    pe = pe.at[:, 1::2].set(jnp.cos(angles))
    return pe


def _pos_enc_kernel(x_ref, pe_ref, o_ref):
    # x_ref/o_ref: (tb, tr, L) tiles; pe_ref: (tr, L).  The broadcast over the leading batch
    # axis is free on the VPU (last two dims — the vreg layout — are identical).
    o_ref[...] = x_ref[...] + pe_ref[...]


class PositionEncoderPallas:
    """JAX/Pallas equivalent of the PyTorch PositionEncoder module (eval-mode forward)."""

    def __init__(self, d_model: int, dropout: float, max_len: int = 5000,
                 max_tile_bytes=None):
        assert d_model > 0 and d_model % 2 == 0, (
            "d_model must be a positive even number (same limitation as the PyTorch original)")
        self.d_model = d_model
        self.dropout_p = float(dropout)
        self.max_len = int(max_len)

        # Buffer built once (mirrors register_buffer in __init__); kept in f32 as reference.
        self.pe = _build_pe_table(d_model, max_len)          # (max_len, d_model), f32

        # ---- generation-aware VMEM sizing ---------------------------------------------
        cap = 64 << 20                                       # conservative (v7x) default
        try:
            info = pltpu.get_tpu_info()
            q = int(getattr(info, "vmem_capacity_bytes", cap))
            if q >= (32 << 20):
                cap = q
        except Exception:
            pass
        # Never let the requested scoped-VMEM limit exceed physical VMEM minus headroom.
        self._vmem_clamp = max(32 << 20, cap - (12 << 20))
        # Per-operand tile budget: 6 tiles (x/out/pe double-buffered) + 4 MiB must fit clamp.
        derived = max(1 << 20, (self._vmem_clamp - (4 << 20)) // 6)   # ~8 MiB v7x, ~18 MiB v6e
        user = (16 << 20) if max_tile_bytes is None else int(max_tile_bytes)
        self._tile_budget = min(user, derived)

        self._pe_view_cache = {}     # (dtype, S, lane_dense) -> device array
        self._impl_cache = {}        # (B, S, D, dtype, donate) -> jitted callable

    # ------------------------------------------------------------------ PE table views ---
    def _pe_view(self, dtype, seq_len: int, lane_dense: bool) -> jnp.ndarray:
        key = (jnp.dtype(dtype), int(seq_len), bool(lane_dense))
        tbl = self._pe_view_cache.get(key)
        if tbl is None:
            tbl = self.pe[:seq_len].astype(dtype)                      # one-time slice/cast
            if lane_dense:
                tbl = tbl.reshape((seq_len * self.d_model) // 128, 128)
            self._pe_view_cache[key] = tbl
        return tbl

    # ------------------------------------------------------------------ static planning ---
    def _plan(self, B: int, S: int, D: int, dtype):
        itemsize = jnp.dtype(dtype).itemsize
        lane_dense = (D % 128 != 0) and ((S * D) % 128 == 0)
        if lane_dense:
            rows, lanes = (S * D) // 128, 128
        else:
            rows, lanes = S, D

        row_mult = max(8, 32 // max(1, itemsize))      # sublane packing: 8 f32 / 16 bf16 / 32 i8
        row_bytes = lanes * itemsize
        budget = self._tile_budget

        # Largest multiple-of-row_mult row count whose tile fits the per-operand budget.
        max_rows = max(row_mult, (budget // max(1, row_bytes)) // row_mult * row_mult)
        if rows <= max_rows:
            tr, n_r = rows, 1                           # block == full row extent (always legal)
        else:
            tr, n_r = max_rows, pl.cdiv(rows, max_rows) # cdiv grid, last block masked

        # Batch blocking when the whole sequence fits one (small) tile.
        tb = 1
        if n_r == 1:
            per_batch = max(1, tr * row_bytes)
            tb_cap = min(B, max(1, budget // per_batch))
            for cand in range(tb_cap, 0, -1):           # largest divisor of B within budget
                if B % cand == 0:
                    tb = cand
                    break
        n_b = B // tb

        x_tile = tb * tr * row_bytes
        pe_tile = tr * row_bytes
        need = 2 * (2 * x_tile + pe_tile) + (4 << 20)   # double-buffered x/out/pe + headroom
        vmem_limit = int(min(max(need, 32 << 20), self._vmem_clamp))

        return lane_dense, rows, lanes, tr, tb, n_r, n_b, vmem_limit

    # ------------------------------------------------------------------ jitted impl -------
    def _get_impl(self, B: int, S: int, D: int, dtype, donate: bool):
        key = (B, S, D, jnp.dtype(dtype), bool(donate))
        impl = self._impl_cache.get(key)
        if impl is not None:
            return impl

        lane_dense, rows, lanes, tr, tb, n_r, n_b, vmem_limit = self._plan(B, S, D, dtype)

        call = pl.pallas_call(
            _pos_enc_kernel,
            out_shape=jax.ShapeDtypeStruct((B, rows, lanes), jnp.dtype(dtype)),
            # Grid = (row_tiles, batch_tiles): batch innermost, so the PE block index
            # (a function of the row tile only) is constant across it -> PE stays resident.
            grid=(n_r, n_b),
            in_specs=[
                pl.BlockSpec((tb, tr, lanes), lambda r, b: (b, r, 0)),   # x view
                pl.BlockSpec((tr, lanes), lambda r, b: (r, 0)),          # PE, resident over b
            ],
            out_specs=pl.BlockSpec((tb, tr, lanes), lambda r, b: (b, r, 0)),
            # Real in-place only when the caller donates x; otherwise no aliasing (avoids
            # XLA's defensive copy of a non-donated input).
            input_output_aliases=({0: 0} if donate else {}),
            compiler_params=pltpu.CompilerParams(
                dimension_semantics=("parallel", "parallel"),
                vmem_limit_bytes=vmem_limit,
            ),
        )

        def impl_fn(x, pe_tbl):
            xv = x.reshape(B, rows, lanes) if lane_dense else x     # bitcast-reshape under jit
            out = call(xv, pe_tbl)
            return out.reshape(B, S, D) if lane_dense else out

        impl = jax.jit(impl_fn, donate_argnums=(0,) if donate else ())
        self._impl_cache[key] = impl
        return impl

    # ------------------------------------------------------------------ public forward ----
    def __call__(self, x: jnp.ndarray, *, deterministic: bool = True,
                 donate: bool = False) -> jnp.ndarray:
        """out = x + pe[:seq_len] (+ dropout in training mode).

        If donate=True, x's buffer is donated and reused in place (do NOT use x afterwards).
        """
        B, S, D = x.shape
        assert D == self.d_model, f"d_model mismatch: got {D}, expected {self.d_model}"
        assert S <= self.max_len, f"seq_len {S} exceeds max_len {self.max_len}"

        if self.dropout_p > 0.0 and not deterministic:
            # TODO(synk): training-mode dropout (pltpu.prng_seed + prng_random_bits mask,
            # scaled by 1/(1-p)) is not implemented; eval-mode (identity) matches PyTorch.
            raise NotImplementedError(
                "PositionEncoderPallas: training-mode dropout (p>0) not implemented")

        lane_dense = (D % 128 != 0) and ((S * D) % 128 == 0)
        pe_tbl = self._pe_view(x.dtype, S, lane_dense)
        impl = self._get_impl(B, S, D, x.dtype, donate)
        return impl(x, pe_tbl)


if __name__ == "__main__":
    root = jax.random.PRNGKey(0)
    k1, k2, k3, k4 = jax.random.split(root, 4)

    # Case 1: small (batch, seq, d_model) shape; d_model=32 < 128 exercises the lane-dense
    # reshape to (B, S*D//128, 128) plus batch-blocking (whole array fits one tile).
    B, S, D = 2, 8, 32
    x1 = jax.random.normal(k1, (B, S, D), dtype=jnp.float32)
    enc1 = PositionEncoderPallas(d_model=D, dropout=0.1, max_len=5000)
    ref1 = x1 + enc1.pe[:S][None, :, :]
    y1 = jax.block_until_ready(enc1(x1))
    assert y1.shape == x1.shape and y1.dtype == x1.dtype
    assert jnp.allclose(y1, ref1, atol=1e-6), "mismatch vs reference (case 1)"

    # Case 2: tiny tile budget -> multi-row-tile cdiv grid, PE resident across the batch axis.
    B2, S2, D2 = 2, 64, 128
    x2 = jax.random.normal(k2, (B2, S2, D2), dtype=jnp.float32)
    enc2 = PositionEncoderPallas(d_model=D2, dropout=0.0, max_len=512, max_tile_bytes=8192)
    ref2 = x2 + enc2.pe[:S2][None, :, :]
    y2 = jax.block_until_ready(enc2(x2))
    assert jnp.allclose(y2, ref2, atol=1e-6), "mismatch vs reference (case 2)"

    # Case 3: donated in-place path (real aliasing; x3 must not be reused after the call).
    B3, S3, D3 = 2, 16, 128
    x3 = jax.random.normal(k3, (B3, S3, D3), dtype=jnp.float32)
    enc3 = PositionEncoderPallas(d_model=D3, dropout=0.0, max_len=128)
    ref3 = jax.block_until_ready(x3 + enc3.pe[:S3][None, :, :])   # materialize before donating
    y3 = jax.block_until_ready(enc3(x3, donate=True))
    assert jnp.allclose(y3, ref3, atol=1e-6), "mismatch vs reference (case 3)"

    # Case 4: bf16 input (16-row sublane packing, batch-blocked).
    B4, S4, D4 = 2, 16, 256
    x4 = jax.random.normal(k4, (B4, S4, D4), dtype=jnp.bfloat16)
    enc4 = PositionEncoderPallas(d_model=D4, dropout=0.0, max_len=64)
    ref4 = x4 + enc4.pe[:S4][None, :, :].astype(jnp.bfloat16)
    y4 = jax.block_until_ready(enc4(x4))
    assert jnp.allclose(y4.astype(jnp.float32), ref4.astype(jnp.float32), atol=1e-2), \
        "mismatch vs reference (case 4)"

    print("KERNEL_OK")
</pallas_src>

<mosaic_0001>
module attributes {stable_mosaic.version = 11 : i64} {
  func.func @_pos_enc_kernel(%arg0: i32, %arg1: i32, %arg2: memref<2x2x128xf32, #tpu.memory_space<vmem>>, %arg3: memref<2x128xf32, #tpu.memory_space<vmem>>, %arg4: memref<2x2x128xf32, #tpu.memory_space<vmem>>) attributes {dimension_semantics = [#tpu.dimension_semantics<parallel>, #tpu.dimension_semantics<parallel>], iteration_bounds = array<i64: 1, 1>, scalar_prefetch = 0 : i64, scratch_operands = 0 : i64, tpu.core_type = #tpu.core_type<tc>, window_params = [{transform_indices = @transform_0, window_bounds = array<i64: 2, 2, 128>}, {transform_indices = @transform_1, window_bounds = array<i64: 2, 128>}, {transform_indices = @transform_2, window_bounds = array<i64: 2, 2, 128>}]} {
    %c0 = arith.constant 0 : index
    %c0_0 = arith.constant 0 : index
    %c0_1 = arith.constant 0 : index
    %0 = vector.load %arg2[%c0, %c0_0, %c0_1] : memref<2x2x128xf32, #tpu.memory_space<vmem>>, vector<2x2x128xf32>
    %c0_2 = arith.constant 0 : index
    %c0_3 = arith.constant 0 : index
    %1 = vector.load %arg3[%c0_2, %c0_3] : memref<2x128xf32, #tpu.memory_space<vmem>>, vector<2x128xf32>
    %2 = vector.shape_cast %1 : vector<2x128xf32> to vector<1x2x128xf32>
    %3 = vector.broadcast %2 : vector<1x2x128xf32> to vector<2x2x128xf32>
    %4 = arith.addf %0, %3 : vector<2x2x128xf32>
    %c0_4 = arith.constant 0 : index
    %c0_5 = arith.constant 0 : index
    %c0_6 = arith.constant 0 : index
    %5 = vector.load %arg4[%c0_4, %c0_5, %c0_6] : memref<2x2x128xf32, #tpu.memory_space<vmem>>, vector<2x2x128xf32>
    tpu.vector_store %arg4[%c0_4, %c0_5, %c0_6], %4 {strides = array<i32>} : memref<2x2x128xf32, #tpu.memory_space<vmem>>, vector<2x2x128xf32>,
    return
  }
  func.func @transform_0(%arg0: i32, %arg1: i32) -> (i32, i32, i32) {
    %c0_i32 = arith.constant 0 : i32
    %c0_i32_0 = arith.constant 0 : i32
    return %arg1, %arg0, %c0_i32 : i32, i32, i32
  }
  func.func @transform_1(%arg0: i32, %arg1: i32) -> (i32, i32) {
    %c0_i32 = arith.constant 0 : i32
    %c0_i32_0 = arith.constant 0 : i32
    return %arg0, %c0_i32 : i32, i32
  }
  func.func @transform_2(%arg0: i32, %arg1: i32) -> (i32, i32, i32) {
    %c0_i32 = arith.constant 0 : i32
    %c0_i32_0 = arith.constant 0 : i32
    return %arg1, %arg0, %c0_i32 : i32, i32, i32
  }
}

</mosaic_0001>

<llo_original>
// kernel: impl_fn.1
$region0: #{impl_fn.1}
  #allocation0 [shape = 'u32[]', space=smem, size = 0x4, offset = 0x4, fixed_abs, tag = 'smem constant byte address 0x4 - core index']
  #allocation1 [shape = 'u32[144,128]{1,0:T(1,128)}', space=vmem, size = 0x12000, scoped, tag = 'internal scratch']
  %s0 = inlined_call_operand.vmem [shape: f32[2,2,128], index: 0, kind: input, shape index: {}]
  %s1 = inlined_call_operand.vmem [shape: f32[2,128], index: 1, kind: input, shape index: {}]
  %s2 = inlined_call_operand.vmem [shape: f32[2,2,128], index: 2, kind: output, shape index: {}]
  %s3 = sld [smem:[#allocation0]]
  $region18: #{impl_fn.1} parent=0
    _
  %s5 = ssub.s32 1, %s3
  %s6 = scalar_select 0, %s5, %s3
  // Predicated region
  $region2: #{impl_fn.1} parent=0 // pred_check
    _
  $region3: #{impl_fn.1} parent=0 // pred_check_branch
    %8 = sbr.rel (0) target = $region5
  $region4: #{impl_fn.1} parent=0 // pred_region
    _
  $region5: #{impl_fn.1} parent=0 // pred_fallthru
    _
  // Predicated region
  $region6: #{impl_fn.1} parent=0 // pred_check
    _
  $region7: #{impl_fn.1} parent=0 // pred_check_branch
    %10 = sbr.rel (0) target = $region9
  $region8: #{impl_fn.1} parent=0 // pred_region
    _
  $region9: #{impl_fn.1} parent=0 // pred_fallthru
    _
  %v11 = vld [vmem:[%s0] sm:$0x3]
  %v12 = vld [vmem:[%s0 + $0x2] sm:$0x3]
  %v13 = vld [vmem:[%s1] sm:$0x3]
  %v14 = vadd.f32 %v11, %v13
  %v15 = vadd.f32 %v12, %v13
  %16 = vst [vmem:[%s2] sm:$0x3] %v14
  %17 = vst [vmem:[%s2 + $0x2] sm:$0x3] %v15
  // Predicated region
  $region10: #{impl_fn.1} parent=0 // pred_check
    _
  $region11: #{impl_fn.1} parent=0 // pred_check_branch
    %19 = sbr.rel (0) target = $region13
  $region12: #{impl_fn.1} parent=0 // pred_region
    _
  $region13: #{impl_fn.1} parent=0 // pred_fallthru
    _
  // Predicated region
  $region14: #{impl_fn.1} parent=0 // pred_check
    _
  $region15: #{impl_fn.1} parent=0 // pred_check_branch
    %21 = sbr.rel (0) target = $region17
  $region16: #{impl_fn.1} parent=0 // pred_region
    _
  $region17: #{impl_fn.1} parent=0 // pred_fallthru
    _

</llo_original>
